<compile_context>
chip_gen: v5e
topology: v5e:2x2
jax: 0.10.0
libtpu: 0.0.40
codegen_flags: <defaults>
</compile_context>

<pallas_src>
import math

import jax
import jax.numpy as jnp
from jax.experimental import pallas as pl
from jax.experimental.pallas import tpu as pltpu


def _round_up(v, m):
    return (v + m - 1) // m * m


def _cdiv(a, b):
    return -(-a // b)


def _row_chunk(rows):
    """Largest sub-chunk (<= 256 rows) that divides the batch tile row count."""
    if rows <= 256:
        return rows
    for c in (256, 128, 64, 32, 16, 8):
        if rows % c == 0:
            return c
    return rows


def _softplus_f32(z):
    # Numerically stable softplus: max(z, 0) + log1p(exp(-|z|)).  exp/log1p hit the
    # EUP slot; max/abs/add are 4-wide VPU work.
    return jnp.maximum(z, 0.0) + jnp.log1p(jnp.exp(-jnp.abs(z)))


# --------------- kernel A: whole reduction resident (k_tiles == 1) ----------------
def _fused_kernel(x_ref, wt_ref, b_ref, out_ref):
    rows = x_ref.shape[0]
    chunk = _row_chunk(rows)
    bias = b_ref[...].astype(jnp.float32)                      # (1, tile_c)
    # Statically unrolled row chunks: chunk c+1's matmul (vector-extended/MXU slot)
    # is independent of chunk c's softplus (EUP slot), so the scheduler can overlap.
    for c in range(rows // chunk):
        r = c * chunk
        z = jax.lax.dot_general(
            x_ref[pl.ds(r, chunk), :], wt_ref[...],
            dimension_numbers=(((1,), (0,)), ((), ())),
            preferred_element_type=jnp.float32,
        ) + bias
        out_ref[pl.ds(r, chunk), :] = _softplus_f32(z).astype(out_ref.dtype)


# --------------- kernel B: K-tiled reduction with f32 accumulator -----------------
def _acc_kernel(x_ref, wt_ref, b_ref, out_ref, acc_ref):
    k = pl.program_id(2)

    @pl.when(k == 0)
    def _():
        acc_ref[...] = jnp.zeros_like(acc_ref)

    acc_ref[...] += jax.lax.dot_general(
        x_ref[...], wt_ref[...],
        dimension_numbers=(((1,), (0,)), ((), ())),
        preferred_element_type=jnp.float32,
    )

    @pl.when(k == pl.num_programs(2) - 1)
    def _():
        z = acc_ref[...] + b_ref[...].astype(jnp.float32)
        out_ref[...] = _softplus_f32(z).astype(out_ref.dtype)


def softplus_linear(x, weight, bias):
    """Eval-mode SoftplusLinear forward: softplus(x @ weight.T + bias)."""
    N, F = x.shape
    C, F2 = weight.shape
    assert F == F2, "weight shape must be (num_classes, in_features)"

    x_item = jnp.dtype(x.dtype).itemsize
    w_item = jnp.dtype(weight.dtype).itemsize
    o_item = x_item

    # ---- VMEM budget (explicit, chip-aware) --------------------------------------
    try:
        phys = int(getattr(pltpu.get_tpu_info(), "vmem_capacity_bytes", 64 << 20))
    except Exception:  # conservative fallback (v7x per-core VMEM)
        phys = 64 << 20
    budget = min(100 << 20, int(phys * 0.75))          # ~100 MiB v5e/v6e, ~48 MiB v7x
    vmem_limit = min(phys, budget + (8 << 20))         # headroom for internal scratch

    # ---- class (lane) tiling: keep output stores lane-dense ----------------------
    C_pad = _round_up(max(C, 1), 128)
    if F * C_pad * w_item <= budget // 3:
        tile_c = C_pad                                  # full class axis resident
    else:
        tile_c = min(C_pad, 512)                        # lane-dense class tiles
        C_pad = _round_up(C_pad, tile_c)
    c_tiles = C_pad // tile_c

    # ---- reduction (K) tiling: only when the weight tile would blow VMEM ---------
    if F * tile_c * w_item <= budget // 3:
        tile_k, F_pad = F, F                            # whole reduction resident
    else:
        tile_k = max(128, (budget // 3) // (2 * tile_c * w_item) // 128 * 128)
        F_pad = _round_up(F, tile_k)
    k_tiles = F_pad // tile_k

    # ---- batch (row) tiling from the remaining VMEM ------------------------------
    if k_tiles == 1:
        w_bufs = 1 if c_tiles == 1 else 2               # single-buffered when resident
        b_bufs = 1 if c_tiles == 1 else 2
        acc_per_row = 0
    else:
        w_bufs, b_bufs = 2, 2
        acc_per_row = tile_c * 4                        # f32 accumulator scratch
    fixed = w_bufs * tile_k * tile_c * w_item + b_bufs * tile_c * 4
    per_row = 2 * tile_k * x_item + 2 * tile_c * o_item + acc_per_row
    avail = max(budget - fixed, 0)
    tile_n_cap = max(8, min(2048, (avail // max(per_row, 1)) // 8 * 8))

    # Minimal padding: pick the tile count first, then the smallest 8-aligned tile.
    n_tiles = max(1, _cdiv(N, tile_n_cap))
    tile_n = _round_up(_cdiv(N, n_tiles), 8)
    # v7x megacore: make sure the parallel grid has >= 2 steps when the batch allows.
    if n_tiles * c_tiles < 2 and N > 8:
        n_tiles = 2
        tile_n = _round_up(_cdiv(N, 2), 8)
    N_pad = n_tiles * tile_n

    # ---- padded / pre-transposed operands (no in-kernel transpose) ---------------
    if (N_pad, F_pad) != (N, F):
        x = jnp.pad(x, ((0, N_pad - N), (0, F_pad - F)))
    wt = jnp.zeros((F_pad, C_pad), weight.dtype).at[:F, :C].set(weight.T)
    b = jnp.zeros((1, C_pad), jnp.float32).at[0, :C].set(bias.astype(jnp.float32))

    cost = pl.CostEstimate(
        flops=2 * N_pad * C_pad * F_pad,
        transcendentals=2 * N_pad * C_pad,              # exp + log1p per output elem
        bytes_accessed=(N_pad * F_pad * x_item + F_pad * C_pad * w_item
                        + C_pad * 4 + N_pad * C_pad * o_item),
    )
    out_shape = jax.ShapeDtypeStruct((N_pad, C_pad), x.dtype)

    def _build_and_run(single_buffer_resident):
        if k_tiles == 1:
            grid = (n_tiles, c_tiles)
            x_spec = pl.BlockSpec((tile_n, F_pad), lambda i, j: (i, 0))
            out_spec = pl.BlockSpec((tile_n, tile_c), lambda i, j: (i, j))
            if single_buffer_resident and c_tiles == 1:
                wt_spec = pl.BlockSpec((F_pad, tile_c), lambda i, j: (0, 0),
                                       pipeline_mode=pl.Buffered(1))
                b_spec = pl.BlockSpec((1, tile_c), lambda i, j: (0, 0),
                                      pipeline_mode=pl.Buffered(1))
            else:
                wt_spec = pl.BlockSpec((F_pad, tile_c), lambda i, j: (0, j))
                b_spec = pl.BlockSpec((1, tile_c), lambda i, j: (0, j))
            kernel = _fused_kernel
            scratch = []
            sem = ("parallel", "parallel")
        else:
            grid = (n_tiles, c_tiles, k_tiles)
            x_spec = pl.BlockSpec((tile_n, tile_k), lambda i, j, k: (i, k))
            wt_spec = pl.BlockSpec((tile_k, tile_c), lambda i, j, k: (k, j))
            if single_buffer_resident and c_tiles == 1:
                b_spec = pl.BlockSpec((1, tile_c), lambda i, j, k: (0, 0),
                                      pipeline_mode=pl.Buffered(1))
            else:
                b_spec = pl.BlockSpec((1, tile_c), lambda i, j, k: (0, j))
            out_spec = pl.BlockSpec((tile_n, tile_c), lambda i, j, k: (i, j))
            kernel = _acc_kernel
            scratch = [pltpu.VMEM((tile_n, tile_c), jnp.float32)]
            sem = ("parallel", "parallel", "arbitrary")

        return pl.pallas_call(
            kernel,
            out_shape=out_shape,
            grid_spec=pltpu.PrefetchScalarGridSpec(
                num_scalar_prefetch=0,
                grid=grid,
                in_specs=[x_spec, wt_spec, b_spec],
                out_specs=out_spec,
                scratch_shapes=scratch,
            ),
            compiler_params=pltpu.CompilerParams(
                dimension_semantics=sem,
                vmem_limit_bytes=vmem_limit,
            ),
            cost_estimate=cost,
        )(x, wt, b)

    try:
        out = _build_and_run(True)
    except Exception:
        # Fallback if Buffered(1) single-buffering is rejected by this JAX build.
        out = _build_and_run(False)

    return out[:N, :C]


def _reference(x, weight, bias):
    return jax.nn.softplus(x @ weight.T + bias)


if __name__ == "__main__":
    key = jax.random.PRNGKey(0)
    k_x, k_w = jax.random.split(key, 2)

    batch, in_features, num_classes = 8, 32, 16

    x = jax.random.normal(k_x, (batch, in_features), dtype=jnp.float32)

    # Deterministic "init_weights": kaiming_normal_ (relu -> std = sqrt(2/fan_in)),
    # bias initialised to zeros, exactly as in the PyTorch module.
    weight = jax.random.normal(k_w, (num_classes, in_features), dtype=jnp.float32) \
        * math.sqrt(2.0 / in_features)
    bias = jnp.zeros((num_classes,), dtype=jnp.float32)

    out = softplus_linear(x, weight, bias)
    jax.block_until_ready(out)

    ref = _reference(x, weight, bias)

    assert out.shape == (batch, num_classes)
    assert jnp.allclose(out, ref, atol=1e-5, rtol=1e-5), \
        f"max abs err {jnp.max(jnp.abs(out - ref))}"

    print("KERNEL_OK")
</pallas_src>

<mosaic_0001>
module attributes {stable_mosaic.version = 11 : i64} {
  func.func @_fused_kernel(%arg0: i32, %arg1: i32, %arg2: memref<8x32xf32, #tpu.memory_space<vmem>>, %arg3: memref<32x128xf32, #tpu.memory_space<vmem>>, %arg4: memref<1x128xf32, #tpu.memory_space<vmem>>, %arg5: memref<8x128xf32, #tpu.memory_space<vmem>>) attributes {dimension_semantics = [#tpu.dimension_semantics<parallel>, #tpu.dimension_semantics<parallel>], iteration_bounds = array<i64: 1, 1>, scalar_prefetch = 0 : i64, scratch_operands = 0 : i64, tpu.core_type = #tpu.core_type<tc>, window_params = [{transform_indices = @transform_0, window_bounds = array<i64: 8, 32>}, {pipeline_mode = #tpu.pipeline_mode<synchronous>, transform_indices = @transform_1, window_bounds = array<i64: 32, 128>}, {pipeline_mode = #tpu.pipeline_mode<synchronous>, transform_indices = @transform_2, window_bounds = array<i64: 1, 128>}, {transform_indices = @transform_3, window_bounds = array<i64: 8, 128>}]} {
    %c0 = arith.constant 0 : index
    %c0_0 = arith.constant 0 : index
    %0 = vector.load %arg4[%c0, %c0_0] : memref<1x128xf32, #tpu.memory_space<vmem>>, vector<1x128xf32>
    %c0_1 = arith.constant 0 : index
    %c0_2 = arith.constant 0 : index
    %1 = vector.load %arg2[%c0_1, %c0_2] : memref<8x32xf32, #tpu.memory_space<vmem>>, vector<8x32xf32>
    %c0_3 = arith.constant 0 : index
    %c0_4 = arith.constant 0 : index
    %2 = vector.load %arg3[%c0_3, %c0_4] : memref<32x128xf32, #tpu.memory_space<vmem>>, vector<32x128xf32>
    %cst = arith.constant dense<0.000000e+00> : vector<8x128xf32>
    %3 = tpu.matmul %1, %2, %cst {dimension_numbers = #tpu.dot_dimension_numbers<[1], [0], [0], [1], [0, 0, 1, 1], [], []>} : vector<8x32xf32>, vector<32x128xf32>, vector<8x128xf32> -> vector<8x128xf32>
    %4 = vector.broadcast %0 : vector<1x128xf32> to vector<8x128xf32>
    %5 = arith.addf %3, %4 : vector<8x128xf32>
    %cst_5 = arith.constant 0.000000e+00 : f32
    %6 = vector.broadcast %cst_5 : f32 to vector<8x128xf32>
    %7 = arith.maximumf %5, %6 : vector<8x128xf32>
    %8 = math.absf %5 : vector<8x128xf32>
    %cst_6 = arith.constant 0.000000e+00 : f32
    %9 = vector.broadcast %cst_6 : f32 to vector<8x128xf32>
    %10 = arith.subf %9, %8 : vector<8x128xf32>
    %11 = math.exp %10 : vector<8x128xf32>
    %12 = math.log1p %11 : vector<8x128xf32>
    %13 = arith.addf %7, %12 : vector<8x128xf32>
    %c0_7 = arith.constant 0 : index
    %c0_8 = arith.constant 0 : index
    %14 = vector.load %arg5[%c0_7, %c0_8] : memref<8x128xf32, #tpu.memory_space<vmem>>, vector<8x128xf32>
    tpu.vector_store %arg5[%c0_7, %c0_8], %13 {strides = array<i32>} : memref<8x128xf32, #tpu.memory_space<vmem>>, vector<8x128xf32>,
    return
  }
  func.func @transform_0(%arg0: i32, %arg1: i32) -> (i32, i32) {
    %c0_i32 = arith.constant 0 : i32
    %c0_i32_0 = arith.constant 0 : i32
    return %arg0, %c0_i32 : i32, i32
  }
  func.func @transform_1(%arg0: i32, %arg1: i32) -> (i32, i32) {
    %c0_i32 = arith.constant 0 : i32
    %c0_i32_0 = arith.constant 0 : i32
    %c0_i32_1 = arith.constant 0 : i32
    return %c0_i32, %c0_i32_0 : i32, i32
  }
  func.func @transform_2(%arg0: i32, %arg1: i32) -> (i32, i32) {
    %c0_i32 = arith.constant 0 : i32
    %c0_i32_0 = arith.constant 0 : i32
    %c0_i32_1 = arith.constant 0 : i32
    return %c0_i32, %c0_i32_0 : i32, i32
  }
  func.func @transform_3(%arg0: i32, %arg1: i32) -> (i32, i32) {
    %c0_i32 = arith.constant 0 : i32
    return %arg0, %arg1 : i32, i32
  }
}

module attributes {stable_mosaic.version = 11 : i64} {
  func.func @_fused_kernel(%arg0: i32, %arg1: i32, %arg2: memref<8x32xf32, #tpu.memory_space<vmem>>, %arg3: memref<32x128xf32, #tpu.memory_space<vmem>>, %arg4: memref<1x128xf32, #tpu.memory_space<vmem>>, %arg5: memref<8x128xf32, #tpu.memory_space<vmem>>) attributes {dimension_semantics = [#tpu.dimension_semantics<parallel>, #tpu.dimension_semantics<parallel>], iteration_bounds = array<i64: 1, 1>, scalar_prefetch = 0 : i64, scratch_operands = 0 : i64, tpu.core_type = #tpu.core_type<tc>, window_params = [{transform_indices = @transform_0, window_bounds = array<i64: 8, 32>}, {transform_indices = @transform_1, window_bounds = array<i64: 32, 128>}, {transform_indices = @transform_2, window_bounds = array<i64: 1, 128>}, {transform_indices = @transform_3, window_bounds = array<i64: 8, 128>}]} {
    %c0 = arith.constant 0 : index
    %c0_0 = arith.constant 0 : index
    %0 = vector.load %arg4[%c0, %c0_0] : memref<1x128xf32, #tpu.memory_space<vmem>>, vector<1x128xf32>
    %c0_1 = arith.constant 0 : index
    %c0_2 = arith.constant 0 : index
    %1 = vector.load %arg2[%c0_1, %c0_2] : memref<8x32xf32, #tpu.memory_space<vmem>>, vector<8x32xf32>
    %c0_3 = arith.constant 0 : index
    %c0_4 = arith.constant 0 : index
    %2 = vector.load %arg3[%c0_3, %c0_4] : memref<32x128xf32, #tpu.memory_space<vmem>>, vector<32x128xf32>
    %cst = arith.constant dense<0.000000e+00> : vector<8x128xf32>
    %3 = tpu.matmul %1, %2, %cst {dimension_numbers = #tpu.dot_dimension_numbers<[1], [0], [0], [1], [0, 0, 1, 1], [], []>} : vector<8x32xf32>, vector<32x128xf32>, vector<8x128xf32> -> vector<8x128xf32>
    %4 = vector.broadcast %0 : vector<1x128xf32> to vector<8x128xf32>
    %5 = arith.addf %3, %4 : vector<8x128xf32>
    %cst_5 = arith.constant 0.000000e+00 : f32
    %6 = vector.broadcast %cst_5 : f32 to vector<8x128xf32>
    %7 = arith.maximumf %5, %6 : vector<8x128xf32>
    %8 = math.absf %5 : vector<8x128xf32>
    %cst_6 = arith.constant 0.000000e+00 : f32
    %9 = vector.broadcast %cst_6 : f32 to vector<8x128xf32>
    %10 = arith.subf %9, %8 : vector<8x128xf32>
    %11 = math.exp %10 : vector<8x128xf32>
    %12 = math.log1p %11 : vector<8x128xf32>
    %13 = arith.addf %7, %12 : vector<8x128xf32>
    %c0_7 = arith.constant 0 : index
    %c0_8 = arith.constant 0 : index
    %14 = vector.load %arg5[%c0_7, %c0_8] : memref<8x128xf32, #tpu.memory_space<vmem>>, vector<8x128xf32>
    tpu.vector_store %arg5[%c0_7, %c0_8], %13 {strides = array<i32>} : memref<8x128xf32, #tpu.memory_space<vmem>>, vector<8x128xf32>,
    return
  }
  func.func @transform_0(%arg0: i32, %arg1: i32) -> (i32, i32) {
    %c0_i32 = arith.constant 0 : i32
    %c0_i32_0 = arith.constant 0 : i32
    return %arg0, %c0_i32 : i32, i32
  }
  func.func @transform_1(%arg0: i32, %arg1: i32) -> (i32, i32) {
    %c0_i32 = arith.constant 0 : i32
    %c0_i32_0 = arith.constant 0 : i32
    return %c0_i32, %arg1 : i32, i32
  }
  func.func @transform_2(%arg0: i32, %arg1: i32) -> (i32, i32) {
    %c0_i32 = arith.constant 0 : i32
    %c0_i32_0 = arith.constant 0 : i32
    return %c0_i32, %arg1 : i32, i32
  }
  func.func @transform_3(%arg0: i32, %arg1: i32) -> (i32, i32) {
    %c0_i32 = arith.constant 0 : i32
    return %arg0, %arg1 : i32, i32
  }
}

</mosaic_0001>

<llo_original>
// kernel: tpu_custom_call.1
$region0: #{tpu_custom_call.1}
  #allocation0 [shape = 'u32[]', space=smem, size = 0x4, offset = 0x4, fixed_abs, tag = 'smem constant byte address 0x4 - core index']
  #allocation1 [shape = 'u32[72,128]{1,0:T(1,128)}', space=vmem, size = 0x9000, scoped, tag = 'internal scratch']
  %s0 = inlined_call_operand.hbm [shape: f32[8,32], index: 0, kind: input, shape index: {}]
  %s1 = inlined_call_operand.hbm [shape: f32[32,128], index: 1, kind: input, shape index: {}]
  %s2 = inlined_call_operand.vmem [shape: f32[1,128], index: 2, kind: input, shape index: {}]
  %s3 = inlined_call_operand.hbm [shape: f32[8,128], index: 3, kind: output, shape index: {}]
  %s4 = sld [smem:[#allocation0]]
  $region30: #{tpu_custom_call.1} parent=0
    _
  %s6 = ssub.s32 1, %s4
  %s7 = scalar_select 0, %s6, %s4
  $region1: #{tpu_custom_call.1} parent=0
    #allocation2 [shape = 'u8[4096]{0}', space=vmem, size = 0x1000, scoped, tag = 'input window, operand 0, single buffered']
    #allocation3 [shape = 's32[1]{0}', space=sflag, size = 0x4, scoped, tag = 'scoped memory for tpu_custom_call.1']
    #allocation4 [shape = 's32[1]{0}', space=sflag, size = 0x4, scoped, tag = 'scoped memory for tpu_custom_call.1']
    #allocation5 [shape = 'u8[16384]{0}', space=vmem, size = 0x4000, scoped, tag = 'input window, operand 1, single buffered']
    #allocation6 [shape = 's32[1]{0}', space=sflag, size = 0x4, scoped, tag = 'scoped memory for tpu_custom_call.1']
    #allocation7 [shape = 'u8[4096]{0}', space=vmem, size = 0x1000, scoped, tag = 'output window, operand 0, single buffered']
    %8 = vsyncpa [#allocation3], 0
    %9 = vsyncpa [#allocation6], 0
    %10 = vsyncpa [#allocation4], 0
    // Predicated region
    $region2: #{tpu_custom_call.1} parent=1 // pred_check
      _
    $region3: #{tpu_custom_call.1} parent=1 // pred_check_branch
      %12 = sbr.rel (0) target = $region5
    $region4: #{tpu_custom_call.1} parent=1 // pred_region
      %14 = vsyncadd [#allocation3], 0
      %s16 = sshll.u32 %s0, 4
      %s17 = int_to_ptr.hbm [resolvable:$true] %s16
      %s18 = sshll.u32 [#allocation2], 4
      %s19 = int_to_ptr.vmem [resolvable:$true] %s18
      %21 = dma.hbm_to_vmem [thread:$0]  %s17, 128, %s19, [#allocation3]
    $region5: #{tpu_custom_call.1} parent=1 // pred_fallthru
      _
    // Predicated region
    $region6: #{tpu_custom_call.1} parent=1 // pred_check
      _
    $region7: #{tpu_custom_call.1} parent=1 // pred_check_branch
      %23 = sbr.rel (0) target = $region9
    $region8: #{tpu_custom_call.1} parent=1 // pred_region
      %25 = vsyncadd [#allocation6], 0
      %s26 = sshll.u32 %s1, 4
      %s27 = int_to_ptr.hbm [resolvable:$true] %s26
      %s28 = sshll.u32 [#allocation5], 4
      %s29 = int_to_ptr.vmem [resolvable:$true] %s28
      %34 = dma.hbm_to_vmem [thread:$0]  %s27, 512, %s29, [#allocation6], 128, 128, 8
    $region9: #{tpu_custom_call.1} parent=1 // pred_fallthru
      _
    // Predicated region
    $region10: #{tpu_custom_call.1} parent=1 // pred_check
      _
    $region11: #{tpu_custom_call.1} parent=1 // pred_check_branch
      %36 = sbr.rel (0) target = $region13
    $region12: #{tpu_custom_call.1} parent=1 // pred_region
      _
    $region13: #{tpu_custom_call.1} parent=1 // pred_fallthru
      _
    // Predicated region
    $region14: #{tpu_custom_call.1} parent=1 // pred_check
      _
    $region15: #{tpu_custom_call.1} parent=1 // pred_check_branch
      %38 = sbr.rel (0) target = $region17
    $region16: #{tpu_custom_call.1} parent=1 // pred_region
      %40 = dma.done [#allocation3], 128
    $region17: #{tpu_custom_call.1} parent=1 // pred_fallthru
      _
    // Predicated region
    $region18: #{tpu_custom_call.1} parent=1 // pred_check
      _
    $region19: #{tpu_custom_call.1} parent=1 // pred_check_branch
      %42 = sbr.rel (0) target = $region21
    $region20: #{tpu_custom_call.1} parent=1 // pred_region
      %44 = dma.done [#allocation6], 512
    $region21: #{tpu_custom_call.1} parent=1 // pred_fallthru
      _
    %v45 = vld [vmem:[%s2] sm:$0x1]
    %v46 = vld [vmem:[#allocation2] sm:$0xff]
    %v47 = vld [vmem:[#allocation5] sm:$0xff]
    %v48 = vld [vmem:[#allocation5 + $0x8] sm:$0xff]
    %v49 = vld [vmem:[#allocation5 + $0x10] sm:$0xff]
    %v50 = vld [vmem:[#allocation5 + $0x18] sm:$0xff]
    %v52 = vperm.slane %v45, 0
    %vm54 = vcmask 261120
    %v56 = vsel %vm54, %v46, 0
    %58 = vmatpush.msra.mxu0 0.0
    %59 = vmatpush.msra.mxu0 0.0
    %60 = vmatpush.msra.mxu0 0.0
    %61 = vmatpush.msra.mxu0 0.0
    %62 = vmatpush.msra.mxu0 0.0
    %63 = vmatpush.msra.mxu0 0.0
    %64 = vmatpush.msra.mxu0 0.0
    %65 = vmatpush.msra.mxu0 0.0
    %66 = vmatpush.msra.mxu0 0.0
    %67 = vmatpush.msra.mxu0 0.0
    %68 = vmatpush.msra.mxu0 0.0
    %69 = vmatpush.msra.mxu0 0.0
    %70 = vmatpush.msra.mxu0 %v50
    %71 = vmatpush.msra.mxu0 %v49
    %72 = vmatpush.msra.mxu0 %v48
    %73 = vmatpush.msra.mxu0 %v47
    %74 = vmatmul.f32.gmra.mxu0 %v56
    %v75 = vpop.f32.mrf.mxu0
    %v76 = vadd.f32 %v52, %v75
    %77 = vdwg.mxu0
    %v78 = vmax.f32 %v76, 0.0
    %v79 = vand.u32 2147483647, %v76
    %v80 = vsub.f32 0.0, %v79
    %v81 = vmul.f32 %v80, 1.442695
    %v82 = vpow.pop %v81
    %v83 = vadd.f32 %v82, 1.0
    %v84 = vlog2.pop %v83
    %v85 = vmul.f32 %v84, 0.6931472
    %v86 = vmul.f32 -0.5, %v82
    %v87 = vadd.f32 %v86, 1.0
    %v88 = vmul.f32 %v87, %v82
    %v89 = vand.u32 2147483647, %v82
    %vm90 = vcmp.lt.f32.partialorder %v89, 0.0004427343
    %v91 = vsel %vm90, %v88, %v85
    %v92 = vadd.f32 %v78, %v91
    %93 = vst [vmem:[#allocation7] sm:$0xff] %v92
    // Predicated region
    $region22: #{tpu_custom_call.1} parent=1 // pred_check
      _
    $region23: #{tpu_custom_call.1} parent=1 // pred_check_branch
      %95 = sbr.rel (0) target = $region25
    $region24: #{tpu_custom_call.1} parent=1 // pred_region
      %97 = vsyncadd [#allocation4], 0
      %s99 = sshll.u32 [#allocation7], 4
      %s100 = int_to_ptr.vmem [resolvable:$true] %s99
      %s101 = sshll.u32 %s3, 4
      %s102 = int_to_ptr.hbm [resolvable:$true] %s101
      %104 = dma.vmem_to_hbm [thread:$0]  %s100, 128, %s102, [#allocation4]
    $region25: #{tpu_custom_call.1} parent=1 // pred_fallthru
      _
    // Predicated region
    $region26: #{tpu_custom_call.1} parent=1 // pred_check
      _
    $region27: #{tpu_custom_call.1} parent=1 // pred_check_branch
      %106 = sbr.rel (0) target = $region29
    $region28: #{tpu_custom_call.1} parent=1 // pred_region
      %108 = dma.done [#allocation4], 128
    $region29: #{tpu_custom_call.1} parent=1 // pred_fallthru
      _
    %109 = vsyncpa [#allocation3], 1
    %110 = vsyncpa [#allocation6], 1
    %111 = vsyncpa [#allocation4], 1

// kernel: tpu_custom_call.1
$region0: #{tpu_custom_call.1}
  #allocation0 [shape = 'u32[]', space=smem, size = 0x4, offset = 0x4, fixed_abs, tag = 'smem constant byte address 0x4 - core index']
  #allocation1 [shape = 'u32[72,128]{1,0:T(1,128)}', space=vmem, size = 0x9000, scoped, tag = 'internal scratch']
  %s0 = inlined_call_operand.hbm [shape: f32[8,32], index: 0, kind: input, shape index: {}]
  %s1 = inlined_call_operand.hbm [shape: f32[32,128], index: 1, kind: input, shape index: {}]
  %s2 = inlined_call_operand.vmem [shape: f32[1,128], index: 2, kind: input, shape index: {}]
  %s3 = inlined_call_operand.hbm [shape: f32[8,128], index: 3, kind: output, shape index: {}]
  %s4 = sld [smem:[#allocation0]]
  $region30: #{tpu_custom_call.1} parent=0
    _
  %s6 = ssub.s32 1, %s4
  %s7 = scalar_select 0, %s6, %s4
  $region1: #{tpu_custom_call.1} parent=0
    #allocation2 [shape = 'u8[4096]{0}', space=vmem, size = 0x1000, scoped, tag = 'input window, operand 0, single buffered']
    #allocation3 [shape = 's32[1]{0}', space=sflag, size = 0x4, scoped, tag = 'scoped memory for tpu_custom_call.1']
    #allocation4 [shape = 's32[1]{0}', space=sflag, size = 0x4, scoped, tag = 'scoped memory for tpu_custom_call.1']
    #allocation5 [shape = 'u8[16384]{0}', space=vmem, size = 0x4000, scoped, tag = 'input window, operand 1, single buffered']
    #allocation6 [shape = 's32[1]{0}', space=sflag, size = 0x4, scoped, tag = 'scoped memory for tpu_custom_call.1']
    #allocation7 [shape = 'u8[4096]{0}', space=vmem, size = 0x1000, scoped, tag = 'output window, operand 0, single buffered']
    %8 = vsyncpa [#allocation3], 0
    %9 = vsyncpa [#allocation6], 0
    %10 = vsyncpa [#allocation4], 0
    // Predicated region
    $region2: #{tpu_custom_call.1} parent=1 // pred_check
      _
    $region3: #{tpu_custom_call.1} parent=1 // pred_check_branch
      %12 = sbr.rel (0) target = $region5
    $region4: #{tpu_custom_call.1} parent=1 // pred_region
      %14 = vsyncadd [#allocation3], 0
      %s16 = sshll.u32 %s0, 4
      %s17 = int_to_ptr.hbm [resolvable:$true] %s16
      %s18 = sshll.u32 [#allocation2], 4
      %s19 = int_to_ptr.vmem [resolvable:$true] %s18
      %21 = dma.hbm_to_vmem [thread:$0]  %s17, 128, %s19, [#allocation3]
    $region5: #{tpu_custom_call.1} parent=1 // pred_fallthru
      _
    // Predicated region
    $region6: #{tpu_custom_call.1} parent=1 // pred_check
      _
    $region7: #{tpu_custom_call.1} parent=1 // pred_check_branch
      %23 = sbr.rel (0) target = $region9
    $region8: #{tpu_custom_call.1} parent=1 // pred_region
      %25 = vsyncadd [#allocation6], 0
      %s26 = sshll.u32 %s1, 4
      %s27 = int_to_ptr.hbm [resolvable:$true] %s26
      %s28 = sshll.u32 [#allocation5], 4
      %s29 = int_to_ptr.vmem [resolvable:$true] %s28
      %34 = dma.hbm_to_vmem [thread:$0]  %s27, 512, %s29, [#allocation6], 128, 128, 8
    $region9: #{tpu_custom_call.1} parent=1 // pred_fallthru
      _
    // Predicated region
    $region10: #{tpu_custom_call.1} parent=1 // pred_check
      _
    $region11: #{tpu_custom_call.1} parent=1 // pred_check_branch
      %36 = sbr.rel (0) target = $region13
    $region12: #{tpu_custom_call.1} parent=1 // pred_region
      _
    $region13: #{tpu_custom_call.1} parent=1 // pred_fallthru
      _
    // Predicated region
    $region14: #{tpu_custom_call.1} parent=1 // pred_check
      _
    $region15: #{tpu_custom_call.1} parent=1 // pred_check_branch
      %38 = sbr.rel (0) target = $region17
    $region16: #{tpu_custom_call.1} parent=1 // pred_region
      %40 = dma.done [#allocation3], 128
    $region17: #{tpu_custom_call.1} parent=1 // pred_fallthru
      _
    // Predicated region
    $region18: #{tpu_custom_call.1} parent=1 // pred_check
      _
    $region19: #{tpu_custom_call.1} parent=1 // pred_check_branch
      %42 = sbr.rel (0) target = $region21
    $region20: #{tpu_custom_call.1} parent=1 // pred_region
      %44 = dma.done [#allocation6], 512
    $region21: #{tpu_custom_call.1} parent=1 // pred_fallthru
      _
    %v45 = vld [vmem:[%s2] sm:$0x1]
    %v46 = vld [vmem:[#allocation2] sm:$0xff]
    %v47 = vld [vmem:[#allocation5] sm:$0xff]
    %v48 = vld [vmem:[#allocation5 + $0x8] sm:$0xff]
    %v49 = vld [vmem:[#allocation5 + $0x10] sm:$0xff]
    %v50 = vld [vmem:[#allocation5 + $0x18] sm:$0xff]
    %v52 = vperm.slane %v45, 0
    %vm54 = vcmask 261120
    %v56 = vsel %vm54, %v46, 0
    %58 = vmatpush.msra.mxu0 0.0
    %59 = vmatpush.msra.mxu0 0.0
    %60 = vmatpush.msra.mxu0 0.0
    %61 = vmatpush.msra.mxu0 0.0
    %62 = vmatpush.msra.mxu0 0.0
    %63 = vmatpush.msra.mxu0 0.0
    %64 = vmatpush.msra.mxu0 0.0
    %65 = vmatpush.msra.mxu0 0.0
    %66 = vmatpush.msra.mxu0 0.0
    %67 = vmatpush.msra.mxu0 0.0
    %68 = vmatpush.msra.mxu0 0.0
    %69 = vmatpush.msra.mxu0 0.0
    %70 = vmatpush.msra.mxu0 %v50
    %71 = vmatpush.msra.mxu0 %v49
    %72 = vmatpush.msra.mxu0 %v48
    %73 = vmatpush.msra.mxu0 %v47
    %74 = vmatmul.f32.gmra.mxu0 %v56
    %v75 = vpop.f32.mrf.mxu0
    %v76 = vadd.f32 %v52, %v75
    %77 = vdwg.mxu0
    %v78 = vmax.f32 %v76, 0.0
    %v79 = vand.u32 2147483647, %v76
    %v80 = vsub.f32 0.0, %v79
    %v81 = vmul.f32 %v80, 1.442695
    %v82 = vpow.pop %v81
    %v83 = vadd.f32 %v82, 1.0
    %v84 = vlog2.pop %v83
    %v85 = vmul.f32 %v84, 0.6931472
    %v86 = vmul.f32 -0.5, %v82
    %v87 = vadd.f32 %v86, 1.0
    %v88 = vmul.f32 %v87, %v82
    %v89 = vand.u32 2147483647, %v82
    %vm90 = vcmp.lt.f32.partialorder %v89, 0.0004427343
    %v91 = vsel %vm90, %v88, %v85
    %v92 = vadd.f32 %v78, %v91
    %93 = vst [vmem:[#allocation7] sm:$0xff] %v92
    // Predicated region
    $region22: #{tpu_custom_call.1} parent=1 // pred_check
      _
    $region23: #{tpu_custom_call.1} parent=1 // pred_check_branch
      %95 = sbr.rel (0) target = $region25
    $region24: #{tpu_custom_call.1} parent=1 // pred_region
      %97 = vsyncadd [#allocation4], 0
      %s99 = sshll.u32 [#allocation7], 4
      %s100 = int_to_ptr.vmem [resolvable:$true] %s99
      %s101 = sshll.u32 %s3, 4
      %s102 = int_to_ptr.hbm [resolvable:$true] %s101
      %104 = dma.vmem_to_hbm [thread:$0]  %s100, 128, %s102, [#allocation4]
    $region25: #{tpu_custom_call.1} parent=1 // pred_fallthru
      _
    // Predicated region
    $region26: #{tpu_custom_call.1} parent=1 // pred_check
      _
    $region27: #{tpu_custom_call.1} parent=1 // pred_check_branch
      %106 = sbr.rel (0) target = $region29
    $region28: #{tpu_custom_call.1} parent=1 // pred_region
      %108 = dma.done [#allocation4], 128
    $region29: #{tpu_custom_call.1} parent=1 // pred_fallthru
      _
    %109 = vsyncpa [#allocation3], 1
    %110 = vsyncpa [#allocation6], 1
    %111 = vsyncpa [#allocation4], 1

</llo_original>
